<compile_context>
chip_gen: v6e
topology: v6e:2x2x1
jax: 0.10.0
libtpu: 0.0.40
codegen_flags: <defaults>
</compile_context>

<pallas_src>
import functools
import numpy as np
import jax
import jax.numpy as jnp
from jax.experimental import pallas as pl
from jax.experimental.pallas import tpu as pltpu

# ----------------------------- config ---------------------------------------
D_FEATURE = 16
D_HIDDEN = 32
D_OUT = 3
LATENT = 32
MULTIRES_VIEW = 4
FREQ_BANDS = [1.0, 2.0, 4.0, 8.0]            # 2**linspace(0, multires-1, multires)
EMB_VIEW = 3 + 3 * 2 * MULTIRES_VIEW          # 27
D0_IN = 3 + EMB_VIEW + 3 + D_FEATURE          # 49 (xyz + emb(view) + normal + feat)
C_PAD = 64                                    # packed-input channel pad (zero rows)
W_SLAB_ROWS = 40                              # 32 + 3, padded to sublane multiple

N_POINTS = 1024
TILE_N = 512                                  # points per grid step (lane axis)


# ----------------------------- kernel ---------------------------------------
def rendering_kernel(x_ref, wa_ref, wb_ref, bias_ref, o_ref):
    """Channel-major MLP.

    x_ref   : (C_PAD, TILE_N) bf16   rows = [xyz(3) | emb_view(27) | nrm(3) | feat(16) | 0]
    wa_ref  : (40, 64) bf16          rows 0:32 = W0^T (zero-padded to K=64),
                                     rows 32:35 = Wb_xyz^T padded to 64 cols (bending)
    wb_ref  : (40, 32) bf16          rows 0:32 = W1^T, rows 32:35 = W2^T
    bias_ref: (32, 4)  f32           col0=b0, col1=b1, col2=[b2;0], col3=[bb_eff;0]
                                     (bb_eff = latent @ Wb_lat + bb, hoisted to wrapper)
    o_ref   : (D_OUT, TILE_N) f32
    """
    dot = functools.partial(jnp.dot, preferred_element_type=jnp.float32)

    x = x_ref[...]                                      # (64, TN) bf16

    w0T = wa_ref[0:D_HIDDEN, :]                         # (32, 64) bf16
    wbT = wa_ref[D_HIDDEN:D_HIDDEN + 3, :]              # (3, 64)  bf16, cols>=3 are zero
    w1T = wb_ref[0:D_HIDDEN, :]                         # (32, 32) bf16
    w2T = wb_ref[D_HIDDEN:D_HIDDEN + 3, :]              # (3, 32)  bf16

    b = bias_ref[...]                                   # (32, 4) f32
    b0 = b[:, 0:1]                                      # (32, 1)
    b1 = b[:, 1:2]                                      # (32, 1)
    b2 = b[0:3, 2:3]                                    # (3, 1)
    bb = b[0:3, 3:4]                                    # (3, 1)  latent@Wb_lat + bb

    # TODO(synk): bending_network is an external module passed at construction;
    # stand-in: additive offset = tanh(Wb_xyz @ xyz + (latent @ Wb_lat + bb)).
    off = jnp.tanh(dot(wbT, x) + bb)                    # (3, TN) f32

    # layer 0 (single fused K=64 matmul + tiny K=3 bending correction):
    #   W0^T @ cat([xyz+off, emb(view), nrm, feat]) = W0^T @ x + W0[0:3,:]^T @ off
    h = dot(w0T, x) + dot(w0T[:, 0:3], off.astype(jnp.bfloat16)) + b0
    h = jnp.maximum(h, 0.0)                             # ReLU (f32)

    # layer 1
    h = jnp.maximum(dot(w1T, h.astype(jnp.bfloat16)) + b1, 0.0)

    # layer 2 (+ squeeze_out sigmoid), lane-dense (3, TN) store
    out = dot(w2T, h.astype(jnp.bfloat16)) + b2         # (3, TN) f32
    o_ref[...] = jax.nn.sigmoid(out)


# ----------------------------- wrapper ---------------------------------------
def rendering_network(xyz, normals, view_dirs, feats, latent, params, *, tile_n=TILE_N):
    n = xyz.shape[0]
    n_pad = ((n + tile_n - 1) // tile_n) * tile_n       # remainder handled by zero-pad
    grid = (n_pad // tile_n,)

    # --- view positional embedding + packed channel-major input slab (plain XLA) ---
    emb_terms = [view_dirs]
    for f in FREQ_BANDS:
        emb_terms.append(jnp.sin(view_dirs * f))
        emb_terms.append(jnp.cos(view_dirs * f))
    x49 = jnp.concatenate([xyz] + emb_terms + [normals, feats], axis=-1)    # (n, 49)
    x_pad = jnp.zeros((n_pad, C_PAD), jnp.float32).at[:n, :D0_IN].set(x49)
    x_cm = x_pad.T.astype(jnp.bfloat16)                                     # (64, n_pad)

    # --- weight slab A: W0^T (K padded to 64) + bending W^T, sublane-aligned ---
    w0_pad = jnp.zeros((C_PAD, D_HIDDEN), jnp.float32).at[:D0_IN, :].set(params["w0"])
    wa = jnp.zeros((W_SLAB_ROWS, C_PAD), jnp.float32)
    wa = wa.at[0:D_HIDDEN, :].set(w0_pad.T)
    wa = wa.at[D_HIDDEN:D_HIDDEN + 3, 0:3].set(params["wb_xyz"].T)
    wa = wa.astype(jnp.bfloat16)

    # --- weight slab B: W1^T stacked over W2^T ---
    wb = jnp.zeros((W_SLAB_ROWS, D_HIDDEN), jnp.float32)
    wb = wb.at[0:D_HIDDEN, :].set(params["w1"].T)
    wb = wb.at[D_HIDDEN:D_HIDDEN + 3, :].set(params["w2"].T)
    wb = wb.astype(jnp.bfloat16)

    # --- bias slab; grid-invariant latent term hoisted out of the kernel ---
    bb_eff = (latent @ params["wb_lat"] + params["bb"]).reshape(-1)         # (3,)
    bias = jnp.zeros((D_HIDDEN, 4), jnp.float32)
    bias = bias.at[:, 0].set(params["b0"].reshape(-1))
    bias = bias.at[:, 1].set(params["b1"].reshape(-1))
    bias = bias.at[0:3, 2].set(params["b2"].reshape(-1))
    bias = bias.at[0:3, 3].set(bb_eff)

    out_cm = pl.pallas_call(
        rendering_kernel,
        out_shape=jax.ShapeDtypeStruct((D_OUT, n_pad), jnp.float32),
        grid_spec=pltpu.PrefetchScalarGridSpec(
            num_scalar_prefetch=0,
            grid=grid,
            in_specs=[
                pl.BlockSpec((C_PAD, tile_n), lambda i: (0, i)),   # packed points
                pl.BlockSpec(wa.shape, lambda i: (0, 0)),          # weight slab A
                pl.BlockSpec(wb.shape, lambda i: (0, 0)),          # weight slab B
                pl.BlockSpec(bias.shape, lambda i: (0, 0)),        # bias slab
            ],
            out_specs=pl.BlockSpec((D_OUT, tile_n), lambda i: (0, i)),
        ),
        compiler_params=pltpu.CompilerParams(
            dimension_semantics=("parallel",),
            vmem_limit_bytes=64 * 1024 * 1024,
        ),
    )(x_cm, wa, wb, bias)

    return out_cm.T[:n]                                                     # (n, 3)


# ----------------------------- param init ------------------------------------
def weight_normed_linear(key, d_in, d_out):
    """nn.Linear + weight_norm (dim=0). At init g = ||v|| per row, so the
    effective weight equals v; still apply w = g * v / ||v|| explicitly."""
    kv, kb = jax.random.split(key)
    bound = 1.0 / np.sqrt(d_in)
    v = jax.random.uniform(kv, (d_out, d_in), jnp.float32, -bound, bound)
    b = jax.random.uniform(kb, (d_out,), jnp.float32, -bound, bound)
    g = jnp.linalg.norm(v, axis=1, keepdims=True)
    w = g * v / jnp.linalg.norm(v, axis=1, keepdims=True)
    return w.T.astype(jnp.float32), b.reshape(1, d_out).astype(jnp.float32)


def make_params(key):
    keys = jax.random.split(key, 4)
    w0, b0 = weight_normed_linear(keys[0], D0_IN, D_HIDDEN)     # (49,32), (1,32)
    w1, b1 = weight_normed_linear(keys[1], D_HIDDEN, D_HIDDEN)  # (32,32), (1,32)
    w2, b2 = weight_normed_linear(keys[2], D_HIDDEN, D_OUT)     # (32,3),  (1,3)
    # bending stand-in (plain linear, no weight norm)
    kb1, kb2, _ = jax.random.split(keys[3], 3)
    bound = 1.0 / np.sqrt(3 + LATENT)
    wbend = jax.random.uniform(kb1, (3 + LATENT, 3), jnp.float32, -bound, bound)
    bb = jax.random.uniform(kb2, (1, 3), jnp.float32, -bound, bound)
    return {"wb_xyz": wbend[0:3], "wb_lat": wbend[3:], "bb": bb,
            "w0": w0, "b0": b0, "w1": w1, "b1": b1, "w2": w2, "b2": b2}


# ----------------------------- pure-JAX reference ----------------------------
def reference(xyz, normals, view_dirs, feats, latent, p):
    offset = jnp.tanh(xyz @ p["wb_xyz"] + latent @ p["wb_lat"] + p["bb"])
    xyz_b = xyz + offset
    emb = [view_dirs]
    for f in FREQ_BANDS:
        emb.append(jnp.sin(view_dirs * f))
        emb.append(jnp.cos(view_dirs * f))
    emb = jnp.concatenate(emb, axis=-1)
    x = jnp.concatenate([xyz_b, emb, normals, feats], axis=-1)
    x = jnp.maximum(x @ p["w0"] + p["b0"], 0.0)
    x = jnp.maximum(x @ p["w1"] + p["b1"], 0.0)
    x = x @ p["w2"] + p["b2"]
    return jax.nn.sigmoid(x)


# ----------------------------- main ------------------------------------------
if __name__ == "__main__":
    key = jax.random.PRNGKey(0)
    k_in, k_par = jax.random.split(key)
    ks = jax.random.split(k_in, 5)
    xyz = jax.random.normal(ks[0], (N_POINTS, 3), jnp.float32)
    normals = jax.random.normal(ks[1], (N_POINTS, 3), jnp.float32)
    view_dirs = jax.random.normal(ks[2], (N_POINTS, 3), jnp.float32)
    view_dirs = view_dirs / jnp.linalg.norm(view_dirs, axis=-1, keepdims=True)
    feats = jax.random.normal(ks[3], (N_POINTS, D_FEATURE), jnp.float32)
    latent = jax.random.normal(ks[4], (1, LATENT), jnp.float32)

    params = make_params(k_par)

    render = jax.jit(rendering_network)
    out = render(xyz, normals, view_dirs, feats, latent, params)
    out = jax.block_until_ready(out)

    ref = reference(xyz, normals, view_dirs, feats, latent, params)
    assert out.shape == (N_POINTS, D_OUT)
    # bf16 MXU operands (f32 accumulation) vs. all-f32 reference -> 5e-3 tolerance.
    np.testing.assert_allclose(np.asarray(out), np.asarray(ref),
                               atol=5e-3, rtol=5e-3)
    print("KERNEL_OK")
</pallas_src>

<mosaic_0001>
module attributes {stable_mosaic.version = 11 : i64} {
  func.func @rendering_kernel(%arg0: i32, %arg1: memref<64x512xbf16, #tpu.memory_space<vmem>>, %arg2: memref<40x64xbf16, #tpu.memory_space<vmem>>, %arg3: memref<40x32xbf16, #tpu.memory_space<vmem>>, %arg4: memref<32x4xf32, #tpu.memory_space<vmem>>, %arg5: memref<3x512xf32, #tpu.memory_space<vmem>>) attributes {dimension_semantics = [#tpu.dimension_semantics<parallel>], iteration_bounds = array<i64: 2>, scalar_prefetch = 0 : i64, scratch_operands = 0 : i64, tpu.core_type = #tpu.core_type<tc>, window_params = [{transform_indices = @transform_0, window_bounds = array<i64: 64, 512>}, {pipeline_mode = #tpu.pipeline_mode<synchronous>, transform_indices = @transform_1, window_bounds = array<i64: 40, 64>}, {pipeline_mode = #tpu.pipeline_mode<synchronous>, transform_indices = @transform_2, window_bounds = array<i64: 40, 32>}, {pipeline_mode = #tpu.pipeline_mode<synchronous>, transform_indices = @transform_3, window_bounds = array<i64: 32, 4>}, {transform_indices = @transform_4, window_bounds = array<i64: 3, 512>}]} {
    %c0 = arith.constant 0 : index
    %c0_0 = arith.constant 0 : index
    %0 = vector.load %arg1[%c0, %c0_0] : memref<64x512xbf16, #tpu.memory_space<vmem>>, vector<64x512xbf16>
    %c0_1 = arith.constant 0 : index
    %c0_2 = arith.constant 0 : index
    %1 = vector.load %arg2[%c0_1, %c0_2] : memref<40x64xbf16, #tpu.memory_space<vmem>>, vector<32x64xbf16>
    %c32 = arith.constant 32 : index
    %c0_3 = arith.constant 0 : index
    %2 = vector.load %arg2[%c32, %c0_3] : memref<40x64xbf16, #tpu.memory_space<vmem>>, vector<3x64xbf16>
    %c0_4 = arith.constant 0 : index
    %c0_5 = arith.constant 0 : index
    %3 = vector.load %arg3[%c0_4, %c0_5] : memref<40x32xbf16, #tpu.memory_space<vmem>>, vector<32x32xbf16>
    %c32_6 = arith.constant 32 : index
    %c0_7 = arith.constant 0 : index
    %4 = vector.load %arg3[%c32_6, %c0_7] : memref<40x32xbf16, #tpu.memory_space<vmem>>, vector<3x32xbf16>
    %c0_8 = arith.constant 0 : index
    %c0_9 = arith.constant 0 : index
    %5 = vector.load %arg4[%c0_8, %c0_9] : memref<32x4xf32, #tpu.memory_space<vmem>>, vector<32x4xf32>
    %6 = vector.extract_strided_slice %5 {offsets = [0, 0], sizes = [32, 1], strides = [1, 1]} : vector<32x4xf32> to vector<32x1xf32>
    %7 = vector.extract_strided_slice %5 {offsets = [0, 1], sizes = [32, 1], strides = [1, 1]} : vector<32x4xf32> to vector<32x1xf32>
    %8 = vector.extract_strided_slice %5 {offsets = [0, 2], sizes = [3, 1], strides = [1, 1]} : vector<32x4xf32> to vector<3x1xf32>
    %9 = vector.extract_strided_slice %5 {offsets = [0, 3], sizes = [3, 1], strides = [1, 1]} : vector<32x4xf32> to vector<3x1xf32>
    %cst = arith.constant dense<0.000000e+00> : vector<3x512xf32>
    %10 = tpu.matmul %2, %0, %cst {dimension_numbers = #tpu.dot_dimension_numbers<[1], [0], [0], [1], [0, 0, 1, 1], [], []>} : vector<3x64xbf16>, vector<64x512xbf16>, vector<3x512xf32> -> vector<3x512xf32>
    %11 = vector.broadcast %9 : vector<3x1xf32> to vector<3x512xf32>
    %12 = arith.addf %10, %11 : vector<3x512xf32>
    %13 = math.tanh %12 : vector<3x512xf32>
    %cst_10 = arith.constant dense<0.000000e+00> : vector<32x512xf32>
    %14 = tpu.matmul %1, %0, %cst_10 {dimension_numbers = #tpu.dot_dimension_numbers<[1], [0], [0], [1], [0, 0, 1, 1], [], []>} : vector<32x64xbf16>, vector<64x512xbf16>, vector<32x512xf32> -> vector<32x512xf32>
    %15 = vector.extract_strided_slice %1 {offsets = [0, 0], sizes = [32, 3], strides = [1, 1]} : vector<32x64xbf16> to vector<32x3xbf16>
    %16 = arith.truncf %13 : vector<3x512xf32> to vector<3x512xbf16>
    %cst_11 = arith.constant dense<0.000000e+00> : vector<32x512xf32>
    %17 = tpu.matmul %15, %16, %cst_11 {dimension_numbers = #tpu.dot_dimension_numbers<[1], [0], [0], [1], [0, 0, 1, 1], [], []>} : vector<32x3xbf16>, vector<3x512xbf16>, vector<32x512xf32> -> vector<32x512xf32>
    %18 = arith.addf %14, %17 : vector<32x512xf32>
    %19 = vector.broadcast %6 : vector<32x1xf32> to vector<32x512xf32>
    %20 = arith.addf %18, %19 : vector<32x512xf32>
    %cst_12 = arith.constant 0.000000e+00 : f32
    %21 = vector.broadcast %cst_12 : f32 to vector<32x512xf32>
    %22 = arith.maximumf %20, %21 : vector<32x512xf32>
    %23 = arith.truncf %22 : vector<32x512xf32> to vector<32x512xbf16>
    %cst_13 = arith.constant dense<0.000000e+00> : vector<32x512xf32>
    %24 = tpu.matmul %3, %23, %cst_13 {dimension_numbers = #tpu.dot_dimension_numbers<[1], [0], [0], [1], [0, 0, 1, 1], [], []>} : vector<32x32xbf16>, vector<32x512xbf16>, vector<32x512xf32> -> vector<32x512xf32>
    %25 = vector.broadcast %7 : vector<32x1xf32> to vector<32x512xf32>
    %26 = arith.addf %24, %25 : vector<32x512xf32>
    %cst_14 = arith.constant 0.000000e+00 : f32
    %27 = vector.broadcast %cst_14 : f32 to vector<32x512xf32>
    %28 = arith.maximumf %26, %27 : vector<32x512xf32>
    %29 = arith.truncf %28 : vector<32x512xf32> to vector<32x512xbf16>
    %cst_15 = arith.constant dense<0.000000e+00> : vector<3x512xf32>
    %30 = tpu.matmul %4, %29, %cst_15 {dimension_numbers = #tpu.dot_dimension_numbers<[1], [0], [0], [1], [0, 0, 1, 1], [], []>} : vector<3x32xbf16>, vector<32x512xbf16>, vector<3x512xf32> -> vector<3x512xf32>
    %31 = vector.broadcast %8 : vector<3x1xf32> to vector<3x512xf32>
    %32 = arith.addf %30, %31 : vector<3x512xf32>
    %33 = arith.negf %32 : vector<3x512xf32>
    %34 = math.exp %33 : vector<3x512xf32>
    %cst_16 = arith.constant 1.000000e+00 : f32
    %35 = vector.broadcast %cst_16 : f32 to vector<3x512xf32>
    %36 = arith.addf %35, %34 : vector<3x512xf32>
    %37 = arith.divf %35, %36 : vector<3x512xf32>
    %c0_17 = arith.constant 0 : index
    %c0_18 = arith.constant 0 : index
    %38 = vector.load %arg5[%c0_17, %c0_18] : memref<3x512xf32, #tpu.memory_space<vmem>>, vector<3x512xf32>
    tpu.vector_store %arg5[%c0_17, %c0_18], %37 {strides = array<i32>} : memref<3x512xf32, #tpu.memory_space<vmem>>, vector<3x512xf32>,
    return
  }
  func.func @transform_0(%arg0: i32) -> (i32, i32) {
    %c0_i32 = arith.constant 0 : i32
    %c0_i32_0 = arith.constant 0 : i32
    return %c0_i32, %arg0 : i32, i32
  }
  func.func @transform_1(%arg0: i32) -> (i32, i32) {
    %c0_i32 = arith.constant 0 : i32
    %c0_i32_0 = arith.constant 0 : i32
    %c0_i32_1 = arith.constant 0 : i32
    return %c0_i32, %c0_i32_0 : i32, i32
  }
  func.func @transform_2(%arg0: i32) -> (i32, i32) {
    %c0_i32 = arith.constant 0 : i32
    %c0_i32_0 = arith.constant 0 : i32
    %c0_i32_1 = arith.constant 0 : i32
    return %c0_i32, %c0_i32_0 : i32, i32
  }
  func.func @transform_3(%arg0: i32) -> (i32, i32) {
    %c0_i32 = arith.constant 0 : i32
    %c0_i32_0 = arith.constant 0 : i32
    %c0_i32_1 = arith.constant 0 : i32
    return %c0_i32, %c0_i32_0 : i32, i32
  }
  func.func @transform_4(%arg0: i32) -> (i32, i32) {
    %c0_i32 = arith.constant 0 : i32
    %c0_i32_0 = arith.constant 0 : i32
    return %c0_i32, %arg0 : i32, i32
  }
}

</mosaic_0001>

<llo_original>
// kernel: rendering_network.1
$region0: #{rendering_network.1}
  #allocation0 [shape = 'u32[]', space=smem, size = 0x4, offset = 0x4, fixed_abs, tag = 'smem constant byte address 0x4 - core index']
  #allocation1 [shape = 'u32[144,128]{1,0:T(1,128)}', space=vmem, size = 0x12000, scoped, tag = 'internal scratch']
  %s0 = inlined_call_operand.vmem [shape: bf16[64,1024], index: 0, kind: input, shape index: {}]
  %s1 = inlined_call_operand.vmem [shape: bf16[40,64], index: 1, kind: input, shape index: {}]
  %s2 = inlined_call_operand.vmem [shape: bf16[40,32], index: 2, kind: input, shape index: {}]
  %s3 = inlined_call_operand.vmem [shape: f32[32,4], index: 3, kind: input, shape index: {}]
  %s4 = inlined_call_operand.hbm [shape: f32[3,1024], index: 4, kind: output, shape index: {}]
  %s5 = sld [smem:[#allocation0]]
  $region72: #{rendering_network.1} parent=0
    _
  %s7 = ssub.s32 1, %s5
  %s8 = scalar_select 0, %s7, %s5
  $region1: #{rendering_network.1} parent=0
    #allocation2 [shape = 'u8[131072]{0}', space=vmem, size = 0x20000, scoped, tag = 'input window, operand 0']
    #allocation3 [shape = 'u8[16384]{0}', space=vmem, size = 0x4000, scoped, tag = 'output window, operand 0']
    #allocation4 [shape = 's32[2]{0}', space=sflag, size = 0x8, scoped, tag = 'scoped memory for rendering_network.1']
    %9 = vsyncpa [#allocation4], 0
    %s10 = scalar_lea.sflag [#allocation4], 1
    %11 = vsyncpa %s10, 0
    loop: start=0, step=1, limit=4
    $region2: #{rendering_network.1} parent=1 // loop_pre_header
      _
    $region3: #{rendering_network.1} parent=1 // loop_header
      %s13 = sphi 0, %s17
      %p14 = scmp.ge.s32.totalorder %s13, 4
      %s23 = sphi 0, %s25
      %s26 = sphi 0, %s23
      %s27 = sphi 0, %s26
      %s43 = sphi 0, %s27
      %s47 = sphi 0, %s47
      %s49 = sphi 0, %s47
      %s50 = sphi 0, %s49
      %s64 = sphi 0, %s50
      %s68 = sphi 0, %s68
      %s70 = sphi 0, %s68
      %s71 = sphi 0, %s70
      %s85 = sphi 0, %s71
      %s89 = sphi 0, %s89
      %s91 = sphi 0, %s89
      %s92 = sphi 0, %s91
      %s106 = sphi 0, %s92
      %s112 = sphi 0, %s114
      %s115 = sphi 0, %s112
      %s116 = sphi 0, %s115
      %s132 = sphi 0, %s116
    $region4: #{rendering_network.1} parent=1 // loop_header_branch
      %16 = sbr.rel (%p14) target = $region8
    $region5: #{rendering_network.1} parent=1 // loop_body
      %s18 = ssub.s32 %s13, 1
      %s19 = ssub.s32 %s13, 2
      %s20 = sadd.s32 %s13, 1
      %s21 = ssub.s32 %s13, %s20
      %p22 = scmp.eq.s32.totalorder %s21, 0
      %s24 = sadd.s32 %s23, 1
      %s25 = scalar_select %p22, %s23, %s24
      %p28 = pneg %p22
      %p29 = scmp.eq.s32.totalorder %s13, 1
      %p30 = por %p28, %p29
      %p31 = scmp.ne.s32.totalorder %s23, %s26
      %p32 = scmp.eq.s32.totalorder %s13, 0
      %p33 = por %p31, %p32
      %p34 = scmp.ne.s32.totalorder %s23, %s26
      %p35 = scmp.eq.s32.totalorder %s18, 1
      %p36 = por %p34, %p35
      %p37 = scmp.ne.s32.totalorder %s26, %s27
      %p38 = scmp.eq.s32.totalorder %s18, 0
      %p39 = por %p37, %p38
      %p40 = scmp.ne.s32.totalorder %s26, %s27
      %p41 = scmp.eq.s32.totalorder %s19, 1
      %p42 = por %p40, %p41
      %p44 = scmp.ne.s32.totalorder %s27, %s43
      %p45 = scmp.eq.s32.totalorder %s19, 0
      %p46 = por %p44, %p45
      %s48 = sadd.s32 %s47, 1
      %p51 = scmp.eq.s32.totalorder %s13, 1
      %p52 = scmp.ne.s32.totalorder %s47, %s49
      %p53 = scmp.eq.s32.totalorder %s13, 0
      %p54 = por %p52, %p53
      %p55 = scmp.ne.s32.totalorder %s47, %s49
      %p56 = scmp.eq.s32.totalorder %s18, 1
      %p57 = por %p55, %p56
      %p58 = scmp.ne.s32.totalorder %s49, %s50
      %p59 = scmp.eq.s32.totalorder %s18, 0
      %p60 = por %p58, %p59
      %p61 = scmp.ne.s32.totalorder %s49, %s50
      %p62 = scmp.eq.s32.totalorder %s19, 1
      %p63 = por %p61, %p62
      %p65 = scmp.ne.s32.totalorder %s50, %s64
      %p66 = scmp.eq.s32.totalorder %s19, 0
      %p67 = por %p65, %p66
      %s69 = sadd.s32 %s68, 1
      %p72 = scmp.eq.s32.totalorder %s13, 1
      %p73 = scmp.ne.s32.totalorder %s68, %s70
      %p74 = scmp.eq.s32.totalorder %s13, 0
      %p75 = por %p73, %p74
      %p76 = scmp.ne.s32.totalorder %s68, %s70
      %p77 = scmp.eq.s32.totalorder %s18, 1
      %p78 = por %p76, %p77
      %p79 = scmp.ne.s32.totalorder %s70, %s71
      %p80 = scmp.eq.s32.totalorder %s18, 0
      %p81 = por %p79, %p80
      %p82 = scmp.ne.s32.totalorder %s70, %s71
      %p83 = scmp.eq.s32.totalorder %s19, 1
      %p84 = por %p82, %p83
      %p86 = scmp.ne.s32.totalorder %s71, %s85
      %p87 = scmp.eq.s32.totalorder %s19, 0
      %p88 = por %p86, %p87
      %s90 = sadd.s32 %s89, 1
      %p93 = scmp.eq.s32.totalorder %s13, 1
      %p94 = scmp.ne.s32.totalorder %s89, %s91
      %p95 = scmp.eq.s32.totalorder %s13, 0
      %p96 = por %p94, %p95
      %p97 = scmp.ne.s32.totalorder %s89, %s91
      %p98 = scmp.eq.s32.totalorder %s18, 1
      %p99 = por %p97, %p98
      %p100 = scmp.ne.s32.totalorder %s91, %s92
      %p101 = scmp.eq.s32.totalorder %s18, 0
      %p102 = por %p100, %p101
      %p103 = scmp.ne.s32.totalorder %s91, %s92
      %p104 = scmp.eq.s32.totalorder %s19, 1
      %p105 = por %p103, %p104
      %p107 = scmp.ne.s32.totalorder %s92, %s106
      %p108 = scmp.eq.s32.totalorder %s19, 0
      %p109 = por %p107, %p108
      %s110 = ssub.s32 %s13, %s20
      %p111 = scmp.eq.s32.totalorder %s110, 0
      %s113 = sadd.s32 %s112, 1
      %s114 = scalar_select %p111, %s112, %s113
      %p117 = pneg %p111
      %p118 = scmp.eq.s32.totalorder %s13, 1
      %p119 = por %p117, %p118
      %p120 = scmp.ne.s32.totalorder %s112, %s115
      %p121 = scmp.eq.s32.totalorder %s13, 0
      %p122 = por %p120, %p121
      %p123 = scmp.ne.s32.totalorder %s112, %s115
      %p124 = scmp.eq.s32.totalorder %s18, 1
      %p125 = por %p123, %p124
      %p126 = scmp.ne.s32.totalorder %s115, %s116
      %p127 = scmp.eq.s32.totalorder %s18, 0
      %p128 = por %p126, %p127
      %p129 = scmp.ne.s32.totalorder %s115, %s116
      %p130 = scmp.eq.s32.totalorder %s19, 1
      %p131 = por %p129, %p130
      %p133 = scmp.ne.s32.totalorder %s116, %s132
      %p134 = scmp.eq.s32.totalorder %s19, 0
      %p135 = por %p133, %p134
      %p136 = scmp.le.s32.totalorder 1, %s13
      %p137 = scmp.lt.s32.totalorder %s13, 3
      %p138 = pnand %p136, %p137
      %p139 = pneg %p138
      // Predicated region
      $region9: #{rendering_network.1} parent=5 // pred_check
        _
      $region10: #{rendering_network.1} parent=5 // pred_check_branch
        %141 = sbr.rel (%p138) target = $region12
      $region11: #{rendering_network.1} parent=5 // pred_region
        %s142 = ssub.s32 %s13, 1
        // Predicated region
        $region13: #{rendering_network.1} parent=11 // pred_check
          %p143 = pneg %p60
        $region14: #{rendering_network.1} parent=11 // pred_check_branch
          %145 = sbr.rel (%p143) target = $region16
        $region15: #{rendering_network.1} parent=11 // pred_region
          _
        $region16: #{rendering_network.1} parent=11 // pred_fallthru
          _
        // Predicated region
        $region17: #{rendering_network.1} parent=11 // pred_check
          %p146 = pneg %p81
        $region18: #{rendering_network.1} parent=11 // pred_check_branch
          %148 = sbr.rel (%p146) target = $region20
        $region19: #{rendering_network.1} parent=11 // pred_region
          _
        $region20: #{rendering_network.1} parent=11 // pred_fallthru
          _
        // Predicated region
        $region21: #{rendering_network.1} parent=11 // pred_check
          %p149 = pneg %p102
        $region22: #{rendering_network.1} parent=11 // pred_check_branch
          %151 = sbr.rel (%p149) target = $region24
        $region23: #{rendering_network.1} parent=11 // pred_region
          _
        $region24: #{rendering_network.1} parent=11 // pred_fallthru
          _
      $region12: #{rendering_network.1} parent=5 // pred_fallthru
        _
      %p152 = scmp.lt.s32.totalorder %s13, 2
      // Predicated region
      $region25: #{rendering_network.1} parent=5 // pred_check
        %p153 = pneg %p152
      $region26: #{rendering_network.1} parent=5 // pred_check_branch
        %155 = sbr.rel (%p153) target = $region28
      $region27: #{rendering_network.1} parent=5 // pred_region
        // Predicated region
        $region29: #{rendering_network.1} parent=27 // pred_check
          %p156 = pneg %p33
        $region30: #{rendering_network.1} parent=27 // pred_check_branch
          %158 = sbr.rel (%p156) target = $region32
        $region31: #{rendering_network.1} parent=27 // pred_region
          %s159 = sand.u32 %s23, 1
          %s160 = sand.u32 %s23, 1
          %s161 = smul.addr %s160, 128
          %s162 = scalar_lea.vmem [#allocation2], %s161
          %s163 = smul.u32 4, %s13
          %s164 = smul.addr %s163, 4
          %s165 = scalar_lea.vmem %s0, %s164
          // Predicated region
          $region33: #{rendering_network.1} parent=31 // pred_check
            _
          $region34: #{rendering_network.1} parent=31 // pred_check_branch
            %167 = sbr.rel (0) target = $region36
          $region35: #{rendering_network.1} parent=31 // pred_region
            // Predicated region
            $region37: #{rendering_network.1} parent=35 // pred_check
              _
            $region38: #{rendering_network.1} parent=35 // pred_check_branch
              %169 = sbr.rel (0) target = $region40
            $region39: #{rendering_network.1} parent=35 // pred_region
              loop: start=0, step=1, limit=1
              $region41: #{rendering_network.1} parent=39 // loop_pre_header
                _
              $region42: #{rendering_network.1} parent=39 // loop_header
                %s171 = sphi 0, %s175
                %p172 = scmp.ge.s32.totalorder %s171, 1
                %s176 = sphi %s165, %s165
                %s177 = sphi %s162, %s162
              $region43: #{rendering_network.1} parent=39 // loop_header_branch
                %174 = sbr.rel (%p172) target = $region47
              $region44: #{rendering_network.1} parent=39 // loop_body
                %v178 = vld [vmem:[%s176] sm:$0xff]
                %179 = vst [vmem:[%s177] sm:$0xff] %v178
                %v180 = vld [vmem:[%s176 + $0x8] sm:$0xff]
                %181 = vst [vmem:[%s177 + $0x8] sm:$0xff] %v180
                %v182 = vld [vmem:[%s176 + $0x20] sm:$0xff]
                %183 = vst [vmem:[%s177 + $0x10] sm:$0xff] %v182
                %v184 = vld [vmem:[%s176 + $0x28] sm:$0xff]
                %185 = vst [vmem:[%s177 + $0x18] sm:$0xff] %v184
                %v186 = vld [vmem:[%s176 + $0x40] sm:$0xff]
                %187 = vst [vmem:[%s177 + $0x20] sm:$0xff] %v186
                %v188 = vld [vmem:[%s176 + $0x48] sm:$0xff]
                %189 = vst [vmem:[%s177 + $0x28] sm:$0xff] %v188
                %v190 = vld [vmem:[%s176 + $0x60] sm:$0xff]
                %191 = vst [vmem:[%s177 + $0x30] sm:$0xff] %v190
                %v192 = vld [vmem:[%s176 + $0x68] sm:$0xff]
                %193 = vst [vmem:[%s177 + $0x38] sm:$0xff] %v192
                %v194 = vld [vmem:[%s176 + $0x80] sm:$0xff]
                %195 = vst [vmem:[%s177 + $0x40] sm:$0xff] %v194
                %v196 = vld [vmem:[%s176 + $0x88] sm:$0xff]
                %197 = vst [vmem:[%s177 + $0x48] sm:$0xff] %v196
                %v198 = vld [vmem:[%s176 + $0xa0] sm:$0xff]
                %199 = vst [vmem:[%s177 + $0x50] sm:$0xff] %v198
                %v200 = vld [vmem:[%s176 + $0xa8] sm:$0xff]
                %201 = vst [vmem:[%s177 + $0x58] sm:$0xff] %v200
                %v202 = vld [vmem:[%s176 + $0xc0] sm:$0xff]
                %203 = vst [vmem:[%s177 + $0x60] sm:$0xff] %v202
                %v204 = vld [vmem:[%s176 + $0xc8] sm:$0xff]
                %205 = vst [vmem:[%s177 + $0x68] sm:$0xff] %v204
                %v206 = vld [vmem:[%s176 + $0xe0] sm:$0xff]
                %207 = vst [vmem:[%s177 + $0x70] sm:$0xff] %v206
                %v208 = vld [vmem:[%s176 + $0xe8] sm:$0xff]
                %209 = vst [vmem:[%s177 + $0x78] sm:$0xff] %v208
              $region45: #{rendering_network.1} parent=39 // loop_footer
                %s175 = sadd.s32 1, %s171
              $region46: #{rendering_network.1} parent=39 // loop_footer_branch
                %170 = sbr.rel target = $region42
              $region47: #{rendering_network.1} parent=39 // loop_exit
                _
            $region40: #{rendering_network.1} parent=35 // pred_fallthru
              _
            // Predicated region
            $region48: #{rendering_network.1} parent=35 // pred_check
              _
            $region49: #{rendering_network.1} parent=35 // pred_check_branch
              %211 = sbr.rel target = $region51
            $region50: #{rendering_network.1} parent=35 // pred_region
              _
            $region51: #{rendering_network.1} parent=35 // pred_fallthru
              _
          $region36: #{rendering_network.1} parent=31 // pred_fallthru
            _
          %212 = vnop
        $region32: #{rendering_network.1} parent=27 // pred_fallthru
          _
      $region28: #{rendering_network.1} parent=5 // pred_fallthru
        _
      %p213 = scmp.le.s32.totalorder 1, %s13
      %p214 = scmp.lt.s32.totalorder %s13, 3
      %p215 = pnand %p213, %p214
      %p216 = pneg %p215
      // Predicated region
      $region52: #{rendering_network.1} parent=5 // pred_check
        _
      $region53: #{rendering_network.1} parent=5 // pred_check_branch
        %218 = sbr.rel (%p215) target = $region55
      $region54: #{rendering_network.1} parent=5 // pred_region
        %s219 = ssub.s32 %s13, 1
        %s220 = sand.u32 %s26, 1
        %s221 = sand.u32 %s26, 1
        %s222 = smul.addr %s221, 128
        %s223 = scalar_lea.vmem [#allocation2], %s222
        // Predicated region
        $region56: #{rendering_network.1} parent=54 // pred_check
          %p224 = pneg %p39
        $region57: #{rendering_network.1} parent=54 // pred_check_branch
          %226 = sbr.rel (%p224) target = $region59
        $region58: #{rendering_network.1} parent=54 // pred_region
          _
        $region59: #{rendering_network.1} parent=54 // pred_fallthru
          _
        %s227 = sand.u32 %s26, 1
        %s228 = sand.u32 %s26, 1
        %s229 = smul.addr %s228, 128
        %s230 = scalar_lea.vmem [#allocation2], %s229
        %p231 = pneg %p39
        %p232 = pneg %p36
        %p233 = pneg %p60
        %p234 = pneg %p57
        %p235 = pneg %p81
        %p236 = pneg %p78
        %p237 = pneg %p102
        %p238 = pneg %p99
        %p239 = pneg %p128
        %p240 = pneg %p125
        %s241 = sand.u32 %s115, 1
        %s242 = scalar_lea.sflag [#allocation4], %s241
        %s243 = sand.u32 %s115, 1
        %s244 = smul.addr %s243, 16
        %s245 = scalar_lea.vmem [#allocation3], %s244
        %s246 = smul.u32 4, %s18
        %s247 = smul.u32 4, %s18
        %v249 = vld [vmem:[%s223] sm:$0xff]
        %v250 = vld [vmem:[%s223 + $0x8] sm:$0xff]
        %v251 = vld [vmem:[%s223 + $0x10] sm:$0xff]
        %v252 = vld [vmem:[%s223 + $0x18] sm:$0xff]
        %v253 = vld [vmem:[%s223 + $0x20] sm:$0xff]
        %v254 = vld [vmem:[%s223 + $0x28] sm:$0xff]
        %v255 = vld [vmem:[%s223 + $0x30] sm:$0xff]
        %v256 = vld [vmem:[%s223 + $0x38] sm:$0xff]
        %v257 = vld [vmem:[%s223 + $0x40] sm:$0xff]
        %v258 = vld [vmem:[%s223 + $0x48] sm:$0xff]
        %v259 = vld [vmem:[%s223 + $0x50] sm:$0xff]
        %v260 = vld [vmem:[%s223 + $0x58] sm:$0xff]
        %v261 = vld [vmem:[%s223 + $0x60] sm:$0xff]
        %v262 = vld [vmem:[%s223 + $0x68] sm:$0xff]
        %v263 = vld [vmem:[%s223 + $0x70] sm:$0xff]
        %v264 = vld [vmem:[%s223 + $0x78] sm:$0xff]
        %v265 = vld [vmem:[%s1] sm:$0xf]
        %v266 = vld [vmem:[%s1 + $0x4] sm:$0xf]
        %v267 = vld [vmem:[%s1 + $0x8] sm:$0xf]
        %v268 = vld [vmem:[%s1 + $0xc] sm:$0xf]
        %v269 = vld [vmem:[%s1 + $0x10] sm:$0x3]
        %v270 = vld [vmem:[%s2] sm:$0xf]
        %v271 = vld [vmem:[%s2 + $0x4] sm:$0xf]
        %v272 = vld [vmem:[%s2 + $0x8] sm:$0xf]
        %v273 = vld [vmem:[%s2 + $0xc] sm:$0xf]
        %v274 = vld [vmem:[%s2 + $0x10] sm:$0x3]
        %v275 = vld [vmem:[%s3] sm:$0xff]
        %v276 = vld [vmem:[%s3 + $0x8] sm:$0xff]
        %v277 = vld [vmem:[%s3 + $0x10] sm:$0xff]
        %v278 = vld [vmem:[%s3 + $0x18] sm:$0xff]
        %280 = vset.pattern.permute.xlu0 3
        %281 = vperm.xlu0 %280, %v275
        %v282 = vpop.permute.xlu0 %281
        %v300 = vunpack.c.l.b16 %v249
        %v301 = vunpack.c.h.b16 %v249
        %v302 = vunpack.c.l.b16 %v250
        %v303 = vunpack.c.h.b16 %v250
        %v304 = vunpack.c.l.b16 %v251
        %v305 = vunpack.c.h.b16 %v251
        %v306 = vunpack.c.l.b16 %v252
        %v307 = vunpack.c.h.b16 %v252
        %v308 = vunpack.c.l.b16 %v253
        %v309 = vunpack.c.h.b16 %v253
        %v310 = vunpack.c.l.b16 %v254
        %v311 = vunpack.c.h.b16 %v254
        %v312 = vunpack.c.l.b16 %v255
        %v313 = vunpack.c.h.b16 %v255
        %v314 = vunpack.c.l.b16 %v256
        %v315 = vunpack.c.h.b16 %v256
        %v316 = vunpack.c.l.b16 %v257
        %v317 = vunpack.c.h.b16 %v257
        %v318 = vunpack.c.l.b16 %v258
        %v319 = vunpack.c.h.b16 %v258
        %v320 = vunpack.c.l.b16 %v259
        %v321 = vunpack.c.h.b16 %v259
        %v322 = vunpack.c.l.b16 %v260
        %v323 = vunpack.c.h.b16 %v260
        %v324 = vunpack.c.l.b16 %v261
        %v325 = vunpack.c.h.b16 %v261
        %v326 = vunpack.c.l.b16 %v262
        %v327 = vunpack.c.h.b16 %v262
        %v328 = vunpack.c.l.b16 %v263
        %v329 = vunpack.c.h.b16 %v263
        %v330 = vunpack.c.l.b16 %v264
        %v331 = vunpack.c.h.b16 %v264
        %v332 = vpack.c.b16 %v304, %v300
        %v333 = vpack.c.b16 %v305, %v301
        %v334 = vpack.c.b16 %v306, %v302
        %v335 = vpack.c.b16 %v307, %v303
        %v336 = vpack.c.b16 %v312, %v308
        %v337 = vpack.c.b16 %v313, %v309
        %v338 = vpack.c.b16 %v314, %v310
        %v339 = vpack.c.b16 %v315, %v311
        %v340 = vpack.c.b16 %v320, %v316
        %v341 = vpack.c.b16 %v321, %v317
        %v342 = vpack.c.b16 %v322, %v318
        %v343 = vpack.c.b16 %v323, %v319
        %v344 = vpack.c.b16 %v328, %v324
        %v345 = vpack.c.b16 %v329, %v325
        %v346 = vpack.c.b16 %v330, %v326
        %v347 = vpack.c.b16 %v331, %v327
        %vm364 = vcmask 523264
        %v366 = vsel %vm364, %v269, 0
        %368 = vmatprep.subr.bf16.mxu0 0
        %369 = vmatpush1.bf16.msra.mxu0 0
        %370 = vmatprep.subr.bf16.mxu0 0
        %371 = vmatpush1.bf16.msra.mxu0 0
        %372 = vmatprep.subr.bf16.mxu0 0
        %373 = vmatpush1.bf16.msra.mxu0 0
        %374 = vmatprep.subr.bf16.mxu0 0
        %375 = vmatpush1.bf16.msra.mxu0 0
        %376 = vmatprep.subr.bf16.mxu0 %v345
        %377 = vmatpush1.bf16.msra.mxu0 %v344
        %378 = vmatprep.subr.bf16.mxu0 %v341
        %379 = vmatpush1.bf16.msra.mxu0 %v340
        %380 = vmatprep.subr.bf16.mxu0 %v337
        %381 = vmatpush1.bf16.msra.mxu0 %v336
        %382 = vmatprep.subr.bf16.mxu0 %v333
        %383 = vmatpush1.bf16.msra.mxu0 %v332
        %384 = vmatprep.subr.bf16.mxu0 0
        %385 = vmatpush2.bf16.msra.mxu0 0
        %386 = vmatprep.subr.bf16.mxu0 0
        %387 = vmatpush2.bf16.msra.mxu0 0
        %388 = vmatprep.subr.bf16.mxu0 0
        %389 = vmatpush2.bf16.msra.mxu0 0
        %390 = vmatprep.subr.bf16.mxu0 0
        %391 = vmatpush2.bf16.msra.mxu0 0
        %392 = vmatprep.subr.bf16.mxu0 0
        %393 = vmatpush2.bf16.msra.mxu0 0
        %394 = vmatprep.subr.bf16.mxu0 0
        %395 = vmatpush2.bf16.msra.mxu0 0
        %396 = vmatprep.subr.bf16.mxu0 0
        %397 = vmatpush2.bf16.msra.mxu0 0
        %398 = vmatprep.subr.bf16.mxu0 0
        %399 = vmatpush2.bf16.msra.mxu0 0
        %400 = vmatprep.mubr.bf16.mxu0 0
        %401 = vmatmul.mubr.bf16.gmra.mxu0 %v366
        %v402 = vpop.f32.mrf.mxu0
        %v403 = vadd.f32 %v282, %v402
        %v404 = vpop.f32.mrf.mxu0
        %v405 = vadd.f32 %v282, %v404
        %v406 = vpop.f32.mrf.mxu0
        %v407 = vpop.f32.mrf.mxu0
        %408 = vdwg.mxu0
        %409 = vmatprep.subr.bf16.mxu0 0
        %410 = vmatpush1.bf16.msra.mxu0 0
        %411 = vmatprep.subr.bf16.mxu0 0
        %412 = vmatpush1.bf16.msra.mxu0 0
        %413 = vmatprep.subr.bf16.mxu0 0
        %414 = vmatpush1.bf16.msra.mxu0 0
        %415 = vmatprep.subr.bf16.mxu0 0
        %416 = vmatpush1.bf16.msra.mxu0 0
        %417 = vmatprep.subr.bf16.mxu0 %v347
        %418 = vmatpush1.bf16.msra.mxu0 %v346
        %419 = vmatprep.subr.bf16.mxu0 %v343
        %420 = vmatpush1.bf16.msra.mxu0 %v342
        %421 = vmatprep.subr.bf16.mxu0 %v339
        %422 = vmatpush1.bf16.msra.mxu0 %v338
        %423 = vmatprep.subr.bf16.mxu0 %v335
        %424 = vmatpush1.bf16.msra.mxu0 %v334
        %425 = vmatprep.subr.bf16.mxu0 0
        %426 = vmatpush2.bf16.msra.mxu0 0
        %427 = vmatprep.subr.bf16.mxu0 0
        %428 = vmatpush2.bf16.msra.mxu0 0
        %429 = vmatprep.subr.bf16.mxu0 0
        %430 = vmatpush2.bf16.msra.mxu0 0
        %431 = vmatprep.subr.bf16.mxu0 0
        %432 = vmatpush2.bf16.msra.mxu0 0
        %433 = vmatprep.subr.bf16.mxu0 0
        %434 = vmatpush2.bf16.msra.mxu0 0
        %435 = vmatprep.subr.bf16.mxu0 0
        %436 = vmatpush2.bf16.msra.mxu0 0
        %437 = vmatprep.subr.bf16.mxu0 0
        %438 = vmatpush2.bf16.msra.mxu0 0
        %439 = vmatprep.subr.bf16.mxu0 0
        %440 = vmatpush2.bf16.msra.mxu0 0
        %441 = vmatprep.mubr.bf16.mxu0 0
        %442 = vmatmul.mubr.bf16.gmra.mxu0 %v366
        %v443 = vpop.f32.mrf.mxu0
        %v444 = vadd.f32 %v282, %v443
        %v445 = vpop.f32.mrf.mxu0
        %v446 = vadd.f32 %v282, %v445
        %v447 = vpop.f32.mrf.mxu0
        %v448 = vpop.f32.mrf.mxu0
        %449 = vdwg.mxu0
        %v450 = vtanh.pop %v403
        %v451 = vtanh.pop %v405
        %v452 = vtanh.pop %v444
        %v453 = vtanh.pop %v446
        %v454 = vpack.c.bf16 %v450, %v450
        %v455 = vpack.c.bf16 %v451, %v451
        %v456 = vpack.c.bf16 %v452, %v452
        %v457 = vpack.c.bf16 %v453, %v453
        %v462 = vunpack.c.l.b16 %v265
        %v463 = vunpack.c.l.b16 %v266
        %v464 = vunpack.c.l.b16 %v267
        %v465 = vunpack.c.l.b16 %v268
        %v466 = vpack.c.b16 %v463, %v462
        %v467 = vpack.c.b16 %v465, %v464
        %vm468 = vcmask 23552
        %v470 = vsel %vm468, %v466, 0
        %v473 = vsel %vm468, %v467, 0
        %vm475 = vcmask 1040384
        %vm476 = vcmask 1041408
        %v477 = vsel %vm475, 4294967295, 65535
        %v478 = vsel %vm476, %v477, 0
        %v480 = vand.u32 %v454, %v478
        %v483 = vand.u32 %v455, %v478
        %v486 = vand.u32 %v456, %v478
        %v489 = vand.u32 %v457, %v478
        %491 = vmatprep.subr.bf16.mxu0 0
        %492 = vmatpush1.bf16.msra.mxu0 0
        %493 = vmatprep.subr.bf16.mxu0 0
        %494 = vmatpush1.bf16.msra.mxu0 0
        %495 = vmatprep.subr.bf16.mxu0 0
        %496 = vmatpush1.bf16.msra.mxu0 0
        %497 = vmatprep.subr.bf16.mxu0 0
        %498 = vmatpush1.bf16.msra.mxu0 0
        %499 = vmatprep.subr.bf16.mxu0 0
        %500 = vmatpush1.bf16.msra.mxu0 0
        %501 = vmatprep.subr.bf16.mxu0 0
        %502 = vmatpush1.bf16.msra.mxu0 0
        %503 = vmatprep.subr.bf16.mxu0 0
        %504 = vmatpush1.bf16.msra.mxu0 0
        %505 = vmatprep.subr.bf16.mxu0 %v483
        %506 = vmatpush1.bf16.msra.mxu0 %v480
        %507 = vmatprep.subr.bf16.mxu0 0
        %508 = vmatpush2.bf16.msra.mxu0 0
        %509 = vmatprep.subr.bf16.mxu0 0
        %510 = vmatpush2.bf16.msra.mxu0 0
        %511 = vmatprep.subr.bf16.mxu0 0
        %512 = vmatpush2.bf16.msra.mxu0 0
        %513 = vmatprep.subr.bf16.mxu0 0
        %514 = vmatpush2.bf16.msra.mxu0 0
        %515 = vmatprep.subr.bf16.mxu0 0
        %516 = vmatpush2.bf16.msra.mxu0 0
        %517 = vmatprep.subr.bf16.mxu0 0
        %518 = vmatpush2.bf16.msra.mxu0 0
        %519 = vmatprep.subr.bf16.mxu0 0
        %520 = vmatpush2.bf16.msra.mxu0 0
        %521 = vmatprep.subr.bf16.mxu0 0
        %522 = vmatpush2.bf16.msra.mxu0 0
        %523 = vmatprep.mubr.bf16.mxu0 0
        %524 = vmatmul.mubr.bf16.gmra.mxu0 %v470
        %v525 = vpop.f32.mrf.mxu0
        %v526 = vadd.f32 0.0, %v525
        %v527 = vpop.f32.mrf.mxu0
        %v528 = vadd.f32 0.0, %v527
        %v529 = vpop.f32.mrf.mxu0
        %v530 = vadd.f32 0.0, %v529
        %v531 = vpop.f32.mrf.mxu0
        %v532 = vadd.f32 0.0, %v531
        %533 = vmatprep.mubr.bf16.mxu0 0
        %534 = vmatmul.mubr.bf16.gmra.mxu0 %v473
        %v535 = vpop.f32.mrf.mxu0
        %v536 = vadd.f32 0.0, %v535
        %v537 = vpop.f32.mrf.mxu0
        %v538 = vadd.f32 0.0, %v537
        %v539 = vpop.f32.mrf.mxu0
        %v540 = vadd.f32 0.0, %v539
        %v541 = vpop.f32.mrf.mxu0
        %v542 = vadd.f32 0.0, %v541
        %543 = vdwg.mxu0
        %544 = vmatprep.subr.bf16.mxu0 0
        %545 = vmatpush1.bf16.msra.mxu0 0
        %546 = vmatprep.subr.bf16.mxu0 0
        %547 = vmatpush1.bf16.msra.mxu0 0
        %548 = vmatprep.subr.bf16.mxu0 0
        %549 = vmatpush1.bf16.msra.mxu0 0
        %550 = vmatprep.subr.bf16.mxu0 0
        %551 = vmatpush1.bf16.msra.mxu0 0
        %552 = vmatprep.subr.bf16.mxu0 0
        %553 = vmatpush1.bf16.msra.mxu0 0
        %554 = vmatprep.subr.bf16.mxu0 0
        %555 = vmatpush1.bf16.msra.mxu0 0
        %556 = vmatprep.subr.bf16.mxu0 0
        %557 = vmatpush1.bf16.msra.mxu0 0
        %558 = vmatprep.subr.bf16.mxu0 %v489
        %559 = vmatpush1.bf16.msra.mxu0 %v486
        %560 = vmatprep.subr.bf16.mxu0 0
        %561 = vmatpush2.bf16.msra.mxu0 0
        %562 = vmatprep.subr.bf16.mxu0 0
        %563 = vmatpush2.bf16.msra.mxu0 0
        %564 = vmatprep.subr.bf16.mxu0 0
        %565 = vmatpush2.bf16.msra.mxu0 0
        %566 = vmatprep.subr.bf16.mxu0 0
        %567 = vmatpush2.bf16.msra.mxu0 0
        %568 = vmatprep.subr.bf16.mxu0 0
        %569 = vmatpush2.bf16.msra.mxu0 0
        %570 = vmatprep.subr.bf16.mxu0 0
        %571 = vmatpush2.bf16.msra.mxu0 0
        %572 = vmatprep.subr.bf16.mxu0 0
        %573 = vmatpush2.bf16.msra.mxu0 0
        %574 = vmatprep.subr.bf16.mxu0 0
        %575 = vmatpush2.bf16.msra.mxu0 0
        %576 = vmatprep.mubr.bf16.mxu0 0
        %577 = vmatmul.mubr.bf16.gmra.mxu0 %v470
        %v578 = vpop.f32.mrf.mxu0
        %v579 = vadd.f32 0.0, %v578
        %v580 = vpop.f32.mrf.mxu0
        %v581 = vadd.f32 0.0, %v580
        %v582 = vpop.f32.mrf.mxu0
        %v583 = vadd.f32 0.0, %v582
        %v584 = vpop.f32.mrf.mxu0
        %v585 = vadd.f32 0.0, %v584
        %586 = vmatprep.mubr.bf16.mxu0 0
        %587 = vmatmul.mubr.bf16.gmra.mxu0 %v473
        %v588 = vpop.f32.mrf.mxu0
        %v589 = vadd.f32 0.0, %v588
        %v590 = vpop.f32.mrf.mxu0
        %v591 = vadd.f32 0.0, %v590
        %v592 = vpop.f32.mrf.mxu0
        %v593 = vadd.f32 0.0, %v592
        %v594 = vpop.f32.mrf.mxu0
        %v595 = vadd.f32 0.0, %v594
        %596 = vdwg.mxu0
        %v597 = vsel %vm364, %v466, 0
        %v599 = vsel %vm364, %v467, 0
        %601 = vmatprep.subr.bf16.mxu0 0
        %602 = vmatpush1.bf16.msra.mxu0 0
        %603 = vmatprep.subr.bf16.mxu0 0
        %604 = vmatpush1.bf16.msra.mxu0 0
        %605 = vmatprep.subr.bf16.mxu0 0
        %606 = vmatpush1.bf16.msra.mxu0 0
        %607 = vmatprep.subr.bf16.mxu0 0
        %608 = vmatpush1.bf16.msra.mxu0 0
        %609 = vmatprep.subr.bf16.mxu0 %v345
        %610 = vmatpush1.bf16.msra.mxu0 %v344
        %611 = vmatprep.subr.bf16.mxu0 %v341
        %612 = vmatpush1.bf16.msra.mxu0 %v340
        %613 = vmatprep.subr.bf16.mxu0 %v337
        %614 = vmatpush1.bf16.msra.mxu0 %v336
        %615 = vmatprep.subr.bf16.mxu0 %v333
        %616 = vmatpush1.bf16.msra.mxu0 %v332
        %617 = vmatprep.subr.bf16.mxu0 0
        %618 = vmatpush2.bf16.msra.mxu0 0
        %619 = vmatprep.subr.bf16.mxu0 0
        %620 = vmatpush2.bf16.msra.mxu0 0
        %621 = vmatprep.subr.bf16.mxu0 0
        %622 = vmatpush2.bf16.msra.mxu0 0
        %623 = vmatprep.subr.bf16.mxu0 0
        %624 = vmatpush2.bf16.msra.mxu0 0
        %625 = vmatprep.subr.bf16.mxu0 0
        %626 = vmatpush2.bf16.msra.mxu0 0
        %627 = vmatprep.subr.bf16.mxu0 0
        %628 = vmatpush2.bf16.msra.mxu0 0
        %629 = vmatprep.subr.bf16.mxu0 0
        %630 = vmatpush2.bf16.msra.mxu0 0
        %631 = vmatprep.subr.bf16.mxu0 0
        %632 = vmatpush2.bf16.msra.mxu0 0
        %633 = vmatprep.mubr.bf16.mxu0 0
        %634 = vmatmul.mubr.bf16.gmra.mxu0 %v597
        %v635 = vpop.f32.mrf.mxu0
        %v636 = vadd.f32 %v526, %v635
        %v637 = vpop.f32.mrf.mxu0
        %v638 = vadd.f32 %v528, %v637
        %v639 = vpop.f32.mrf.mxu0
        %v640 = vadd.f32 %v530, %v639
        %v641 = vpop.f32.mrf.mxu0
        %v642 = vadd.f32 %v532, %v641
        %643 = vmatprep.mubr.bf16.mxu0 0
        %644 = vmatmul.mubr.bf16.gmra.mxu0 %v599
        %v645 = vpop.f32.mrf.mxu0
        %v646 = vadd.f32 %v536, %v645
        %v647 = vpop.f32.mrf.mxu0
        %v648 = vadd.f32 %v538, %v647
        %v649 = vpop.f32.mrf.mxu0
        %v650 = vadd.f32 %v540, %v649
        %v651 = vpop.f32.mrf.mxu0
        %v652 = vadd.f32 %v542, %v651
        %653 = vdwg.mxu0
        %654 = vmatprep.subr.bf16.mxu0 0
        %655 = vmatpush1.bf16.msra.mxu0 0
        %656 = vmatprep.subr.bf16.mxu0 0
        %657 = vmatpush1.bf16.msra.mxu0 0
        %658 = vmatprep.subr.bf16.mxu0 0
        %659 = vmatpush1.bf16.msra.mxu0 0
        %660 = vmatprep.subr.bf16.mxu0 0
        %661 = vmatpush1.bf16.msra.mxu0 0
        %662 = vmatprep.subr.bf16.mxu0 %v347
        %663 = vmatpush1.bf16.msra.mxu0 %v346
        %664 = vmatprep.subr.bf16.mxu0 %v343
        %665 = vmatpush1.bf16.msra.mxu0 %v342
        %666 = vmatprep.subr.bf16.mxu0 %v339
        %667 = vmatpush1.bf16.msra.mxu0 %v338
        %668 = vmatprep.subr.bf16.mxu0 %v335
        %669 = vmatpush1.bf16.msra.mxu0 %v334
        %670 = vmatprep.subr.bf16.mxu0 0
        %671 = vmatpush2.bf16.msra.mxu0 0
        %672 = vmatprep.subr.bf16.mxu0 0
        %673 = vmatpush2.bf16.msra.mxu0 0
        %674 = vmatprep.subr.bf16.mxu0 0
        %675 = vmatpush2.bf16.msra.mxu0 0
        %676 = vmatprep.subr.bf16.mxu0 0
        %677 = vmatpush2.bf16.msra.mxu0 0
        %678 = vmatprep.subr.bf16.mxu0 0
        %679 = vmatpush2.bf16.msra.mxu0 0
        %680 = vmatprep.subr.bf16.mxu0 0
        %681 = vmatpush2.bf16.msra.mxu0 0
        %682 = vmatprep.subr.bf16.mxu0 0
        %683 = vmatpush2.bf16.msra.mxu0 0
        %684 = vmatprep.subr.bf16.mxu0 0
        %685 = vmatpush2.bf16.msra.mxu0 0
        %686 = vmatprep.mubr.bf16.mxu0 0
        %687 = vmatmul.mubr.bf16.gmra.mxu0 %v597
        %v688 = vpop.f32.mrf.mxu0
        %v689 = vadd.f32 %v579, %v688
        %v690 = vpop.f32.mrf.mxu0
        %v691 = vadd.f32 %v581, %v690
        %v692 = vpop.f32.mrf.mxu0
        %v693 = vadd.f32 %v583, %v692
        %v694 = vpop.f32.mrf.mxu0
        %v695 = vadd.f32 %v585, %v694
        %696 = vmatprep.mubr.bf16.mxu0 0
        %697 = vmatmul.mubr.bf16.gmra.mxu0 %v599
        %v698 = vpop.f32.mrf.mxu0
        %v699 = vadd.f32 %v589, %v698
        %v700 = vpop.f32.mrf.mxu0
        %v701 = vadd.f32 %v591, %v700
        %v702 = vpop.f32.mrf.mxu0
        %v703 = vadd.f32 %v593, %v702
        %v704 = vpop.f32.mrf.mxu0
        %v705 = vadd.f32 %v595, %v704
        %706 = vdwg.mxu0
        %707 = vset.pattern.permute.xlu0 0
        %708 = vperm.xlu0 %707, %v275
        %v709 = vpop.permute.xlu0 %708
        %712 = vset.pattern.permute.xlu0 0
        %713 = vperm.xlu0 %712, %v276
        %v714 = vpop.permute.xlu0 %713
        %717 = vset.pattern.permute.xlu0 0
        %718 = vperm.xlu0 %717, %v277
        %v719 = vpop.permute.xlu0 %718
        %722 = vset.pattern.permute.xlu0 0
        %723 = vperm.xlu0 %722, %v278
        %v724 = vpop.permute.xlu0 %723
        %v726 = vadd.f32 %v636, %v709
        %v727 = vadd.f32 %v638, %v709
        %v728 = vadd.f32 %v689, %v709
        %v729 = vadd.f32 %v691, %v709
        %v730 = vadd.f32 %v640, %v714
        %v731 = vadd.f32 %v642, %v714
        %v732 = vadd.f32 %v693, %v714
        %v733 = vadd.f32 %v695, %v714
        %v734 = vadd.f32 %v646, %v719
        %v735 = vadd.f32 %v648, %v719
        %v736 = vadd.f32 %v699, %v719
        %v737 = vadd.f32 %v701, %v719
        %v738 = vadd.f32 %v650, %v724
        %v739 = vadd.f32 %v652, %v724
        %v740 = vadd.f32 %v703, %v724
        %v741 = vadd.f32 %v705, %v724
        %v742 = vmax.f32 %v726, 0.0
        %v743 = vmax.f32 %v727, 0.0
        %v744 = vmax.f32 %v728, 0.0
        %v745 = vmax.f32 %v729, 0.0
        %v746 = vmax.f32 %v730, 0.0
        %v747 = vmax.f32 %v731, 0.0
        %v748 = vmax.f32 %v732, 0.0
        %v749 = vmax.f32 %v733, 0.0
        %v750 = vmax.f32 %v734, 0.0
        %v751 = vmax.f32 %v735, 0.0
        %v752 = vmax.f32 %v736, 0.0
        %v753 = vmax.f32 %v737, 0.0
        %v754 = vmax.f32 %v738, 0.0
        %v755 = vmax.f32 %v739, 0.0
        %v756 = vmax.f32 %v740, 0.0
        %v757 = vmax.f32 %v741, 0.0
        %v758 = vpack.c.bf16 %v746, %v742
        %v759 = vpack.c.bf16 %v747, %v743
        %v760 = vpack.c.bf16 %v748, %v744
        %v761 = vpack.c.bf16 %v749, %v745
        %v762 = vpack.c.bf16 %v754, %v750
        %v763 = vpack.c.bf16 %v755, %v751
        %v764 = vpack.c.bf16 %v756, %v752
        %v765 = vpack.c.bf16 %v757, %v753
        %766 = vset.pattern.permute.xlu0 1
        %767 = vperm.xlu0 %766, %v275
        %v768 = vpop.permute.xlu0 %767
        %770 = vset.pattern.permute.xlu0 1
        %771 = vperm.xlu0 %770, %v276
        %v772 = vpop.permute.xlu0 %771
        %774 = vset.pattern.permute.xlu0 1
        %775 = vperm.xlu0 %774, %v277
        %v776 = vpop.permute.xlu0 %775
        %778 = vset.pattern.permute.xlu0 1
        %779 = vperm.xlu0 %778, %v278
        %v780 = vpop.permute.xlu0 %779
        %v786 = vunpack.c.l.b16 %v270
        %v787 = vunpack.c.l.b16 %v271
        %v788 = vunpack.c.l.b16 %v272
        %v789 = vunpack.c.l.b16 %v273
        %v790 = vpack.c.b16 %v787, %v786
        %v791 = vpack.c.b16 %v789, %v788
        %vm792 = vcmask 261120
        %v794 = vsel %vm792, %v790, 0
        %v797 = vsel %vm792, %v791, 0
        %799 = vmatprep.subr.bf16.mxu0 0
        %800 = vmatpush1.bf16.msra.mxu0 0
        %801 = vmatprep.subr.bf16.mxu0 0
        %802 = vmatpush1.bf16.msra.mxu0 0
        %803 = vmatprep.subr.bf16.mxu0 0
        %804 = vmatpush1.bf16.msra.mxu0 0
        %805 = vmatprep.subr.bf16.mxu0 0
        %806 = vmatpush1.bf16.msra.mxu0 0
        %807 = vmatprep.subr.bf16.mxu0 0
        %808 = vmatpush1.bf16.msra.mxu0 0
        %809 = vmatprep.subr.bf16.mxu0 0
        %810 = vmatpush1.bf16.msra.mxu0 0
        %811 = vmatprep.subr.bf16.mxu0 %v763
        %812 = vmatpush1.bf16.msra.mxu0 %v762
        %813 = vmatprep.subr.bf16.mxu0 %v759
        %814 = vmatpush1.bf16.msra.mxu0 %v758
        %815 = vmatprep.subr.bf16.mxu0 0
        %816 = vmatpush2.bf16.msra.mxu0 0
        %817 = vmatprep.subr.bf16.mxu0 0
        %818 = vmatpush2.bf16.msra.mxu0 0
        %819 = vmatprep.subr.bf16.mxu0 0
        %820 = vmatpush2.bf16.msra.mxu0 0
        %821 = vmatprep.subr.bf16.mxu0 0
        %822 = vmatpush2.bf16.msra.mxu0 0
        %823 = vmatprep.subr.bf16.mxu0 0
        %824 = vmatpush2.bf16.msra.mxu0 0
        %825 = vmatprep.subr.bf16.mxu0 0
        %826 = vmatpush2.bf16.msra.mxu0 0
        %827 = vmatprep.subr.bf16.mxu0 0
        %828 = vmatpush2.bf16.msra.mxu0 0
        %829 = vmatprep.subr.bf16.mxu0 0
        %830 = vmatpush2.bf16.msra.mxu0 0
        %831 = vmatprep.mubr.bf16.mxu0 0
        %832 = vmatmul.mubr.bf16.gmra.mxu0 %v794
        %v833 = vpop.f32.mrf.mxu0
        %v834 = vadd.f32 %v768, %v833
        %v835 = vpop.f32.mrf.mxu0
        %v836 = vadd.f32 %v768, %v835
        %v837 = vpop.f32.mrf.mxu0
        %v838 = vadd.f32 %v772, %v837
        %v839 = vpop.f32.mrf.mxu0
        %v840 = vadd.f32 %v772, %v839
        %841 = vmatprep.mubr.bf16.mxu0 0
        %842 = vmatmul.mubr.bf16.gmra.mxu0 %v797
        %v843 = vpop.f32.mrf.mxu0
        %v844 = vadd.f32 %v776, %v843
        %v845 = vpop.f32.mrf.mxu0
        %v846 = vadd.f32 %v776, %v845
        %v847 = vpop.f32.mrf.mxu0
        %v848 = vadd.f32 %v780, %v847
        %v849 = vpop.f32.mrf.mxu0
        %v850 = vadd.f32 %v780, %v849
        %851 = vdwg.mxu0
        %852 = vmatprep.subr.bf16.mxu0 0
        %853 = vmatpush1.bf16.msra.mxu0 0
        %854 = vmatprep.subr.bf16.mxu0 0
        %855 = vmatpush1.bf16.msra.mxu0 0
        %856 = vmatprep.subr.bf16.mxu0 0
        %857 = vmatpush1.bf16.msra.mxu0 0
        %858 = vmatprep.subr.bf16.mxu0 0
        %859 = vmatpush1.bf16.msra.mxu0 0
        %860 = vmatprep.subr.bf16.mxu0 0
        %861 = vmatpush1.bf16.msra.mxu0 0
        %862 = vmatprep.subr.bf16.mxu0 0
        %863 = vmatpush1.bf16.msra.mxu0 0
        %864 = vmatprep.subr.bf16.mxu0 %v765
        %865 = vmatpush1.bf16.msra.mxu0 %v764
        %866 = vmatprep.subr.bf16.mxu0 %v761
        %867 = vmatpush1.bf16.msra.mxu0 %v760
        %868 = vmatprep.subr.bf16.mxu0 0
        %869 = vmatpush2.bf16.msra.mxu0 0
        %870 = vmatprep.subr.bf16.mxu0 0
        %871 = vmatpush2.bf16.msra.mxu0 0
        %872 = vmatprep.subr.bf16.mxu0 0
        %873 = vmatpush2.bf16.msra.mxu0 0
        %874 = vmatprep.subr.bf16.mxu0 0
        %875 = vmatpush2.bf16.msra.mxu0 0
        %876 = vmatprep.subr.bf16.mxu0 0
        %877 = vmatpush2.bf16.msra.mxu0 0
        %878 = vmatprep.subr.bf16.mxu0 0
        %879 = vmatpush2.bf16.msra.mxu0 0
        %880 = vmatprep.subr.bf16.mxu0 0
        %881 = vmatpush2.bf16.msra.mxu0 0
        %882 = vmatprep.subr.bf16.mxu0 0
        %883 = vmatpush2.bf16.msra.mxu0 0
        %884 = vmatprep.mubr.bf16.mxu0 0
        %885 = vmatmul.mubr.bf16.gmra.mxu0 %v794
        %v886 = vpop.f32.mrf.mxu0
        %v887 = vadd.f32 %v768, %v886
        %v888 = vpop.f32.mrf.mxu0
        %v889 = vadd.f32 %v768, %v888
        %v890 = vpop.f32.mrf.mxu0
        %v891 = vadd.f32 %v772, %v890
        %v892 = vpop.f32.mrf.mxu0
        %v893 = vadd.f32 %v772, %v892
        %894 = vmatprep.mubr.bf16.mxu0 0
        %895 = vmatmul.mubr.bf16.gmra.mxu0 %v797
        %v896 = vpop.f32.mrf.mxu0
        %v897 = vadd.f32 %v776, %v896
        %v898 = vpop.f32.mrf.mxu0
        %v899 = vadd.f32 %v776, %v898
        %v900 = vpop.f32.mrf.mxu0
        %v901 = vadd.f32 %v780, %v900
        %v902 = vpop.f32.mrf.mxu0
        %v903 = vadd.f32 %v780, %v902
        %904 = vdwg.mxu0
        %v905 = vmax.f32 %v834, 0.0
        %v906 = vmax.f32 %v836, 0.0
        %v907 = vmax.f32 %v887, 0.0
        %v908 = vmax.f32 %v889, 0.0
        %v909 = vmax.f32 %v838, 0.0
        %v910 = vmax.f32 %v840, 0.0
        %v911 = vmax.f32 %v891, 0.0
        %v912 = vmax.f32 %v893, 0.0
        %v913 = vmax.f32 %v844, 0.0
        %v914 = vmax.f32 %v846, 0.0
        %v915 = vmax.f32 %v897, 0.0
        %v916 = vmax.f32 %v899, 0.0
        %v917 = vmax.f32 %v848, 0.0
        %v918 = vmax.f32 %v850, 0.0
        %v919 = vmax.f32 %v901, 0.0
        %v920 = vmax.f32 %v903, 0.0
        %v921 = vpack.c.bf16 %v909, %v905
        %v922 = vpack.c.bf16 %v910, %v906
        %v923 = vpack.c.bf16 %v911, %v907
        %v924 = vpack.c.bf16 %v912, %v908
        %v925 = vpack.c.bf16 %v917, %v913
        %v926 = vpack.c.bf16 %v918, %v914
        %v927 = vpack.c.bf16 %v919, %v915
        %v928 = vpack.c.bf16 %v920, %v916
        %929 = vset.pattern.permute.xlu0 2
        %930 = vperm.xlu0 %929, %v275
        %v931 = vpop.permute.xlu0 %930
        %v934 = vsel %vm792, %v274, 0
        %936 = vmatprep.subr.bf16.mxu0 0
        %937 = vmatpush1.bf16.msra.mxu0 0
        %938 = vmatprep.subr.bf16.mxu0 0
        %939 = vmatpush1.bf16.msra.mxu0 0
        %940 = vmatprep.subr.bf16.mxu0 0
        %941 = vmatpush1.bf16.msra.mxu0 0
        %942 = vmatprep.subr.bf16.mxu0 0
        %943 = vmatpush1.bf16.msra.mxu0 0
        %944 = vmatprep.subr.bf16.mxu0 0
        %945 = vmatpush1.bf16.msra.mxu0 0
        %946 = vmatprep.subr.bf16.mxu0 0
        %947 = vmatpush1.bf16.msra.mxu0 0
        %948 = vmatprep.subr.bf16.mxu0 %v926
        %949 = vmatpush1.bf16.msra.mxu0 %v925
        %950 = vmatprep.subr.bf16.mxu0 %v922
        %951 = vmatpush1.bf16.msra.mxu0 %v921
        %952 = vmatprep.subr.bf16.mxu0 0
        %953 = vmatpush2.bf16.msra.mxu0 0
        %954 = vmatprep.subr.bf16.mxu0 0
        %955 = vmatpush2.bf16.msra.mxu0 0
        %956 = vmatprep.subr.bf16.mxu0 0
        %957 = vmatpush2.bf16.msra.mxu0 0
        %958 = vmatprep.subr.bf16.mxu0 0
        %959 = vmatpush2.bf16.msra.mxu0 0
        %960 = vmatprep.subr.bf16.mxu0 0
        %961 = vmatpush2.bf16.msra.mxu0 0
        %962 = vmatprep.subr.bf16.mxu0 0
        %963 = vmatpush2.bf16.msra.mxu0 0
        %964 = vmatprep.subr.bf16.mxu0 0
        %965 = vmatpush2.bf16.msra.mxu0 0
        %966 = vmatprep.subr.bf16.mxu0 0
        %967 = vmatpush2.bf16.msra.mxu0 0
        %968 = vmatprep.mubr.bf16.mxu0 0
        %969 = vmatmul.mubr.bf16.gmra.mxu0 %v934
        %v970 = vpop.f32.mrf.mxu0
        %v971 = vadd.f32 %v931, %v970
        %v972 = vpop.f32.mrf.mxu0
        %v973 = vadd.f32 %v931, %v972
        %v974 = vpop.f32.mrf.mxu0
        %v975 = vpop.f32.mrf.mxu0
        %976 = vdwg.mxu0
        %977 = vmatprep.subr.bf16.mxu0 0
        %978 = vmatpush1.bf16.msra.mxu0 0
        %979 = vmatprep.subr.bf16.mxu0 0
        %980 = vmatpush1.bf16.msra.mxu0 0
        %981 = vmatprep.subr.bf16.mxu0 0
        %982 = vmatpush1.bf16.msra.mxu0 0
        %983 = vmatprep.subr.bf16.mxu0 0
        %984 = vmatpush1.bf16.msra.mxu0 0
        %985 = vmatprep.subr.bf16.mxu0 0
        %986 = vmatpush1.bf16.msra.mxu0 0
        %987 = vmatprep.subr.bf16.mxu0 0
        %988 = vmatpush1.bf16.msra.mxu0 0
        %989 = vmatprep.subr.bf16.mxu0 %v928
        %990 = vmatpush1.bf16.msra.mxu0 %v927
        %991 = vmatprep.subr.bf16.mxu0 %v924
        %992 = vmatpush1.bf16.msra.mxu0 %v923
        %993 = vmatprep.subr.bf16.mxu0 0
        %994 = vmatpush2.bf16.msra.mxu0 0
        %995 = vmatprep.subr.bf16.mxu0 0
        %996 = vmatpush2.bf16.msra.mxu0 0
        %997 = vmatprep.subr.bf16.mxu0 0
        %998 = vmatpush2.bf16.msra.mxu0 0
        %999 = vmatprep.subr.bf16.mxu0 0
        %1000 = vmatpush2.bf16.msra.mxu0 0
        %1001 = vmatprep.subr.bf16.mxu0 0
        %1002 = vmatpush2.bf16.msra.mxu0 0
        %1003 = vmatprep.subr.bf16.mxu0 0
        %1004 = vmatpush2.bf16.msra.mxu0 0
        %1005 = vmatprep.subr.bf16.mxu0 0
        %1006 = vmatpush2.bf16.msra.mxu0 0
        %1007 = vmatprep.subr.bf16.mxu0 0
        %1008 = vmatpush2.bf16.msra.mxu0 0
        %1009 = vmatprep.mubr.bf16.mxu0 0
        %1010 = vmatmul.mubr.bf16.gmra.mxu0 %v934
        %v1011 = vpop.f32.mrf.mxu0
        %v1012 = vadd.f32 %v931, %v1011
        %v1013 = vpop.f32.mrf.mxu0
        %v1014 = vadd.f32 %v931, %v1013
        %v1015 = vpop.f32.mrf.mxu0
        %v1016 = vpop.f32.mrf.mxu0
        %1017 = vdwg.mxu0
        %v1018 = vxor.u32 %v971, 2147483648
        %v1019 = vxor.u32 %v973, 2147483648
        %v1020 = vxor.u32 %v1012, 2147483648
        %v1021 = vxor.u32 %v1014, 2147483648
        %v1022 = vmul.f32 %v1018, 1.442695
        %v1023 = vpow.pop %v1022
        %v1024 = vmul.f32 %v1019, 1.442695
        %v1025 = vpow.pop %v1024
        %v1026 = vmul.f32 %v1020, 1.442695
        %v1027 = vpow.pop %v1026
        %v1028 = vmul.f32 %v1021, 1.442695
        %v1029 = vpow.pop %v1028
        %v1030 = vadd.f32 %v1023, 1.0
        %v1031 = vadd.f32 %v1025, 1.0
        %v1032 = vadd.f32 %v1027, 1.0
        %v1033 = vadd.f32 %v1029, 1.0
        %v1034 = vrcp.pop %v1030
        %v1035 = vmul.f32 1.0, %v1034
        %v1036 = vrcp.pop %v1031
        %v1037 = vmul.f32 1.0, %v1036
        %v1038 = vrcp.pop %v1032
        %v1039 = vmul.f32 1.0, %v1038
        %v1040 = vrcp.pop %v1033
        %v1041 = vmul.f32 1.0, %v1040
        %v1046 = vcombine.low %v1035, %v1037
        %v1047 = vcombine.low %v1039, %v1041
        %1050 = vst [vmem:[%s245] sm:$0x77] %v1046
        %1051 = vst [vmem:[%s245 + $0x8] sm:$0x77] %v1047
        %s1052 = sand.u32 %s115, 1
        %s1053 = scalar_lea.sflag [#allocation4], %s1052
        %s1054 = sand.u32 %s115, 1
        %s1055 = smul.addr %s1054, 16
        %s1056 = scalar_lea.vmem [#allocation3], %s1055
        // Predicated region
        $region60: #{rendering_network.1} parent=54 // pred_check
          %p1057 = pneg %p125
        $region61: #{rendering_network.1} parent=54 // pred_check_branch
          %1059 = sbr.rel (%p1057) target = $region63
        $region62: #{rendering_network.1} parent=54 // pred_region
          %s1060 = smul.u32 4, %s18
          %s1062 = ssub.s32 256, 256
          %1063 = vsyncadd %s1053, %s1062
          %s1064 = smul.addr %s1060, 64
          %s1065 = scalar_lea.hbm %s4, %s1064
          %s1067 = sshll.u32 %s1056, 4
          %s1068 = int_to_ptr.vmem [resolvable:$true] %s1067
          %1070 = dma.vmem_to_hbm [thread:$0]  %s1068, 256, %s1065, %s1053
        $region63: #{rendering_network.1} parent=54 // pred_fallthru
          _
      $region55: #{rendering_network.1} parent=5 // pred_fallthru
        _
      %p1071 = scmp.le.s32.totalorder 2, %s13
      // Predicated region
      $region64: #{rendering_network.1} parent=5 // pred_check
        %p1072 = pneg %p1071
      $region65: #{rendering_network.1} parent=5 // pred_check_branch
        %1074 = sbr.rel (%p1072) target = $region67
      $region66: #{rendering_network.1} parent=5 // pred_region
        %s1075 = ssub.s32 %s13, 2
        // Predicated region
        $region68: #{rendering_network.1} parent=66 // pred_check
          %p1076 = pneg %p131
        $region69: #{rendering_network.1} parent=66 // pred_check_branch
          %1078 = sbr.rel (%p1076) target = $region71
        $region70: #{rendering_network.1} parent=66 // pred_region
          %s1079 = sand.u32 %s116, 1
          %s1080 = scalar_lea.sflag [#allocation4], %s1079
          %s1081 = sand.u32 %s116, 1
          %s1082 = smul.addr %s1081, 16
          %s1083 = scalar_lea.vmem [#allocation3], %s1082
          %1084 = dma.done %s1080, 256
        $region71: #{rendering_network.1} parent=66 // pred_fallthru
          _
      $region67: #{rendering_network.1} parent=5 // pred_fallthru
        _
    $region6: #{rendering_network.1} parent=1 // loop_footer
      %s17 = sadd.s32 1, %s13
    $region7: #{rendering_network.1} parent=1 // loop_footer_branch
      %12 = sbr.rel target = $region3
    $region8: #{rendering_network.1} parent=1 // loop_exit
      _
    %1085 = vsyncpa [#allocation4], 1
    %s1086 = scalar_lea.sflag [#allocation4], 1
    %1087 = vsyncpa %s1086, 1

</llo_original>
